<compile_context>
chip_gen: v7x
topology: tpu7x:2x2x1
jax: 0.10.0
libtpu: 0.0.40
codegen_flags: <defaults>
</compile_context>

<pallas_src>
import jax
import jax.numpy as jnp
from jax.experimental import pallas as pl
from jax.experimental.pallas import tpu as pltpu


_LANE_CANDIDATES = (2048, 1024, 512, 256, 128)
_BLOCK_BYTES_TARGET = 4 * 1024 * 1024   # ~4 MiB/buffer -> 2x(in+out) = 16 MiB pipelined
_VMEM_LIMIT_BYTES = 32 * 1024 * 1024    # explicit scoped-VMEM limit: raises v5e's 16 MiB
                                        # default, stays under v7x's 64 MiB physical VMEM


def _round_down(x: int, m: int) -> int:
    return (x // m) * m


def _sublanes_for(dtype) -> int:
    itemsize = jnp.dtype(dtype).itemsize
    return max(8, 32 // max(1, itemsize))  # 8 for f32, 16 for bf16, 32 for int8/fp8


def _chip_info():
    """Best-effort chip query (never raises): (has_bf16_vpu, num_tensorcores)."""
    kind = ""
    try:
        kind = jax.devices()[0].device_kind.lower()
    except Exception:
        pass
    # v2-v5 have no bf16 VPU/EUP path; v6e/v7x do.
    has_bf16_vpu = not any(t in kind for t in ("v2", "v3", "v4", "v5"))
    if any(t in kind for t in ("v5 lite", "v5e", "v5lite", "v6")):
        num_cores = 1          # single-TensorCore parts
    else:
        num_cores = 2          # v4/v5p megacore, v7x dual-TC; also the safe default
                               # (extra grid steps cost only ~0.35us on 1-TC chips)
    try:
        info = pltpu.get_tpu_info()
        for attr in ("num_cores", "cores_per_chip", "num_tensorcores", "tensorcore_count"):
            v = getattr(info, attr, None)
            if isinstance(v, int) and 0 < v <= 8:
                num_cores = v
                break
    except Exception:
        pass
    return has_bf16_vpu, num_cores


def _make_silu_kernel(compute_dtype):
    """Elementwise hot path of Lambda's func: x * sigmoid(x)."""
    cdt = jnp.dtype(compute_dtype)
    use_eup_rcp = cdt == jnp.float32  # f32 path: push the divide onto the EUP slot

    def kernel(x_ref, o_ref):
        x = x_ref[...].astype(cdt)
        den = jnp.exp(-x) + jnp.asarray(1.0, cdt)          # exp on EUP
        if use_eup_rcp:
            inv = pl.reciprocal(den, approx=True)          # vrcp on EUP (frees VALU slots)
        else:
            inv = jnp.asarray(1.0, cdt) / den              # native bf16 on v6e/v7x VPU
        o_ref[...] = (x * inv).astype(o_ref.dtype)

    return kernel


def _pick_lanes(n_elem: int, sublanes: int):
    """Widest lane width (multiple of 128) that factors n_elem exactly."""
    for c in _LANE_CANDIDATES:
        if n_elem % c == 0 and (n_elem // c) >= 2 * sublanes:
            return c
    for c in _LANE_CANDIDATES:
        if n_elem % c == 0:
            return c
    return None


def _pick_block_rows(rows: int, lanes: int, itemsize: int, sublanes: int,
                     num_cores: int) -> int:
    """Rows per block: VMEM-budgeted, sublane-aligned; on multi-TC chips also small
    enough for >= 2 programs per TensorCore (per-core double-buffering + balance)."""
    budget_rows = max(
        sublanes, _round_down(_BLOCK_BYTES_TARGET // (lanes * itemsize), sublanes)
    )
    block_rows = budget_rows
    if num_cores > 1:
        target_programs = 2 * num_cores
        if rows >= target_programs * sublanes:
            block_rows = min(block_rows,
                             max(sublanes, _round_down(rows // target_programs, sublanes)))
        elif rows >= num_cores * sublanes:
            block_rows = min(block_rows,
                             max(sublanes, _round_down(rows // num_cores, sublanes)))
    if rows <= block_rows:
        return rows  # single full block (full-extent blocks are exempt from (8,128))
    return block_rows


def lambda_forward(x_nchw: jax.Array, donate_input: bool = False) -> jax.Array:
    """Apply Lambda(func=silu) to a tensor via a Pallas TPU kernel.

    donate_input=True sets input_output_aliases={0: 0}; only enable it when the
    caller no longer needs x (e.g. under jit with donate_argnums)."""
    orig_shape = x_nchw.shape
    orig_dtype = x_nchw.dtype
    n_elem = x_nchw.size
    itemsize = jnp.dtype(orig_dtype).itemsize
    sublanes = _sublanes_for(orig_dtype)

    has_bf16_vpu, num_cores = _chip_info()

    # Compute dtype: bf16-native on chips with bf16 VPU/EUP, else f32.
    if jnp.dtype(orig_dtype) == jnp.bfloat16 and has_bf16_vpu:
        compute_dtype = jnp.bfloat16
    else:
        # TODO(synk): int8/fp8 inputs would need a quantized SiLU (scale + rounding,
        # e.g. pltpu.stochastic_round); here they just round-trip through f32.
        compute_dtype = jnp.float32
    kernel = _make_silu_kernel(compute_dtype)

    cost = pl.CostEstimate(
        flops=4 * n_elem,
        transcendentals=2 * n_elem,
        bytes_accessed=2 * n_elem * itemsize,
    )
    cparams = pltpu.CompilerParams(
        dimension_semantics=("parallel",),
        vmem_limit_bytes=_VMEM_LIMIT_BYTES,
    )
    io_aliases = {0: 0} if donate_input else {}

    lanes = _pick_lanes(n_elem, sublanes)

    if lanes is not None:
        # ---- lane-dense 2D slab (rows, lanes), exact factorization, no padding ----
        rows = n_elem // lanes
        x2d = x_nchw.reshape(rows, lanes)
        block_rows = _pick_block_rows(rows, lanes, itemsize, sublanes, num_cores)
        block_shape = (block_rows, lanes)
        grid = (pl.cdiv(rows, block_rows),)

        out2d = pl.pallas_call(
            kernel,
            out_shape=jax.ShapeDtypeStruct((rows, lanes), orig_dtype),
            grid_spec=pltpu.PrefetchScalarGridSpec(
                num_scalar_prefetch=0,
                grid=grid,
                in_specs=[pl.BlockSpec(block_shape, lambda i: (i, 0))],
                out_specs=pl.BlockSpec(block_shape, lambda i: (i, 0)),
            ),
            compiler_params=cparams,
            cost_estimate=cost,
            input_output_aliases=io_aliases,
        )(x2d)
        return out2d.reshape(orig_shape)

    # ---- masked-tail 1-D path: n not divisible by 128 -------------------------------
    # No pad copy on input and no slice copy on output: Pallas masks the partial last
    # block, so this stays at 1 HBM read + 1 write (the old pad->kernel->slice path
    # cost ~3 passes).  Masked garbage in the tail flows through exp() but never
    # reaches the output.
    x_flat = x_nchw.reshape(-1)
    vreg_elems = sublanes * 128
    budget_elems = max(vreg_elems,
                       _round_down(_BLOCK_BYTES_TARGET // itemsize, vreg_elems))
    if n_elem <= budget_elems:
        block_elems = n_elem  # single full block (full-extent dim exempt from lane rule)
    else:
        block_elems = budget_elems
        if num_cores > 1:
            per_prog = _round_down(n_elem // (2 * num_cores), vreg_elems)
            if per_prog >= vreg_elems:
                block_elems = min(block_elems, per_prog)
    grid = (pl.cdiv(n_elem, block_elems),)

    out_flat = pl.pallas_call(
        kernel,
        out_shape=jax.ShapeDtypeStruct((n_elem,), orig_dtype),
        grid_spec=pltpu.PrefetchScalarGridSpec(
            num_scalar_prefetch=0,
            grid=grid,
            in_specs=[pl.BlockSpec((block_elems,), lambda i: (i,))],
            out_specs=pl.BlockSpec((block_elems,), lambda i: (i,)),
        ),
        compiler_params=cparams,
        cost_estimate=cost,
        input_output_aliases=io_aliases,
    )(x_flat)
    return out_flat.reshape(orig_shape)


if __name__ == "__main__":
    key = jax.random.PRNGKey(0)
    x = jax.random.normal(key, (2, 4, 16, 16), dtype=jnp.float32)  # NCHW activations

    y = lambda_forward(x)
    jax.block_until_ready(y)

    # Reference: Lambda(func)(x) == func(x); func = silu.
    y_ref = x * jax.nn.sigmoid(x)
    assert y.shape == x.shape and y.dtype == x.dtype
    # The sigmoid denominator uses the EUP approximate reciprocal (pl.reciprocal
    # approx=True), so allow a small relative tolerance vs. the exact reference.
    assert jnp.allclose(y, y_ref, atol=1e-3, rtol=5e-3)

    print("KERNEL_OK")
</pallas_src>

<mosaic_0001>
module attributes {stable_mosaic.version = 11 : i64} {
  func.func @kernel(%arg0: i32, %arg1: memref<8x128xf32, #tpu.memory_space<vmem>>, %arg2: memref<8x128xf32, #tpu.memory_space<vmem>>) attributes {dimension_semantics = [#tpu.dimension_semantics<parallel>], iteration_bounds = array<i64: 2>, scalar_prefetch = 0 : i64, scratch_operands = 0 : i64, tpu.core_type = #tpu.core_type<tc>, window_params = [{transform_indices = @transform_0, window_bounds = array<i64: 8, 128>}, {transform_indices = @transform_1, window_bounds = array<i64: 8, 128>}]} {
    %c0 = arith.constant 0 : index
    %c0_0 = arith.constant 0 : index
    %0 = vector.load %arg1[%c0, %c0_0] : memref<8x128xf32, #tpu.memory_space<vmem>>, vector<8x128xf32>
    %cst = arith.constant 0.000000e+00 : f32
    %1 = vector.broadcast %cst : f32 to vector<8x128xf32>
    %2 = arith.subf %1, %0 : vector<8x128xf32>
    %3 = math.exp %2 : vector<8x128xf32>
    %cst_1 = arith.constant 1.000000e+00 : f32
    %4 = vector.broadcast %cst_1 : f32 to vector<8x128xf32>
    %5 = arith.addf %3, %4 : vector<8x128xf32>
    %6 = tpu.reciprocal %5 {approx = true} : vector<8x128xf32> -> vector<8x128xf32>
    %7 = arith.mulf %0, %6 : vector<8x128xf32>
    %c0_2 = arith.constant 0 : index
    %c0_3 = arith.constant 0 : index
    %8 = vector.load %arg2[%c0_2, %c0_3] : memref<8x128xf32, #tpu.memory_space<vmem>>, vector<8x128xf32>
    tpu.vector_store %arg2[%c0_2, %c0_3], %7 {strides = array<i32>} : memref<8x128xf32, #tpu.memory_space<vmem>>, vector<8x128xf32>,
    return
  }
  func.func @transform_0(%arg0: i32) -> (i32, i32) {
    %c0_i32 = arith.constant 0 : i32
    %c0_i32_0 = arith.constant 0 : i32
    return %arg0, %c0_i32 : i32, i32
  }
  func.func @transform_1(%arg0: i32) -> (i32, i32) {
    %c0_i32 = arith.constant 0 : i32
    %c0_i32_0 = arith.constant 0 : i32
    return %arg0, %c0_i32 : i32, i32
  }
}

</mosaic_0001>

<llo_original>
// kernel: tpu_custom_call.1
$region0: #{tpu_custom_call.1}
  #allocation0 [shape = 'u32[]', space=smem, size = 0x4, offset = 0x4, fixed_abs, tag = 'smem constant byte address 0x4 - core index']
  #allocation1 [shape = 'u32[144,128]{1,0:T(1,128)}', space=vmem, size = 0x12000, scoped, tag = 'internal scratch']
  %s0 = inlined_call_operand.hbm [shape: f32[16,128], index: 0, kind: input, shape index: {}]
  %s1 = inlined_call_operand.hbm [shape: f32[16,128], index: 1, kind: output, shape index: {}]
  %s2 = sld [smem:[#allocation0]]
  $region41: #{tpu_custom_call.1} parent=0
    _
  %s4 = ssub.s32 1, %s2
  %s5 = scalar_select 0, %s4, %s2
  $region1: #{tpu_custom_call.1} parent=0
    #allocation2 [shape = 'u8[8192]{0}', space=vmem, size = 0x2000, scoped, tag = 'input window, operand 0']
    #allocation3 [shape = 's32[2]{0}', space=sflag, size = 0x8, scoped, tag = 'scoped memory for tpu_custom_call.1']
    #allocation4 [shape = 's32[2]{0}', space=sflag, size = 0x8, scoped, tag = 'scoped memory for tpu_custom_call.1']
    #allocation5 [shape = 'u8[8192]{0}', space=vmem, size = 0x2000, scoped, tag = 'output window, operand 0']
    %6 = vsyncpa [#allocation3], 0
    %s7 = scalar_lea.sflag [#allocation3], 1
    %8 = vsyncpa %s7, 0
    %9 = vsyncpa [#allocation4], 0
    %s10 = scalar_lea.sflag [#allocation4], 1
    %11 = vsyncpa %s10, 0
    loop: start=0, step=1, limit=4
    $region2: #{tpu_custom_call.1} parent=1 // loop_pre_header
      _
    $region3: #{tpu_custom_call.1} parent=1 // loop_header
      %s13 = sphi 0, %s17
      %p14 = scmp.ge.s32.totalorder %s13, 4
      %s23 = sphi 0, %s25
      %s26 = sphi 0, %s23
      %s27 = sphi 0, %s26
      %s43 = sphi 0, %s27
      %s49 = sphi 0, %s51
      %s52 = sphi 0, %s49
      %s53 = sphi 0, %s52
      %s69 = sphi 0, %s53
    $region4: #{tpu_custom_call.1} parent=1 // loop_header_branch
      %16 = sbr.rel (%p14) target = $region8
    $region5: #{tpu_custom_call.1} parent=1 // loop_body
      %s18 = ssub.s32 %s13, 1
      %s19 = ssub.s32 %s13, 2
      %s20 = sadd.s32 %s13, 1
      %s21 = ssub.s32 %s13, %s20
      %p22 = scmp.eq.s32.totalorder %s21, 0
      %s24 = sadd.s32 %s23, 1
      %s25 = scalar_select %p22, %s23, %s24
      %p28 = pneg %p22
      %p29 = scmp.eq.s32.totalorder %s13, 1
      %p30 = por %p28, %p29
      %p31 = scmp.ne.s32.totalorder %s23, %s26
      %p32 = scmp.eq.s32.totalorder %s13, 0
      %p33 = por %p31, %p32
      %p34 = scmp.ne.s32.totalorder %s23, %s26
      %p35 = scmp.eq.s32.totalorder %s18, 1
      %p36 = por %p34, %p35
      %p37 = scmp.ne.s32.totalorder %s26, %s27
      %p38 = scmp.eq.s32.totalorder %s18, 0
      %p39 = por %p37, %p38
      %p40 = scmp.ne.s32.totalorder %s26, %s27
      %p41 = scmp.eq.s32.totalorder %s19, 1
      %p42 = por %p40, %p41
      %p44 = scmp.ne.s32.totalorder %s27, %s43
      %p45 = scmp.eq.s32.totalorder %s19, 0
      %p46 = por %p44, %p45
      %s47 = ssub.s32 %s13, %s20
      %p48 = scmp.eq.s32.totalorder %s47, 0
      %s50 = sadd.s32 %s49, 1
      %s51 = scalar_select %p48, %s49, %s50
      %p54 = pneg %p48
      %p55 = scmp.eq.s32.totalorder %s13, 1
      %p56 = por %p54, %p55
      %p57 = scmp.ne.s32.totalorder %s49, %s52
      %p58 = scmp.eq.s32.totalorder %s13, 0
      %p59 = por %p57, %p58
      %p60 = scmp.ne.s32.totalorder %s49, %s52
      %p61 = scmp.eq.s32.totalorder %s18, 1
      %p62 = por %p60, %p61
      %p63 = scmp.ne.s32.totalorder %s52, %s53
      %p64 = scmp.eq.s32.totalorder %s18, 0
      %p65 = por %p63, %p64
      %p66 = scmp.ne.s32.totalorder %s52, %s53
      %p67 = scmp.eq.s32.totalorder %s19, 1
      %p68 = por %p66, %p67
      %p70 = scmp.ne.s32.totalorder %s53, %s69
      %p71 = scmp.eq.s32.totalorder %s19, 0
      %p72 = por %p70, %p71
      %p73 = scmp.le.s32.totalorder 1, %s13
      %p74 = scmp.lt.s32.totalorder %s13, 3
      %p75 = pnand %p73, %p74
      %p76 = pneg %p75
      // Predicated region
      $region9: #{tpu_custom_call.1} parent=5 // pred_check
        _
      $region10: #{tpu_custom_call.1} parent=5 // pred_check_branch
        %78 = sbr.rel (%p75) target = $region12
      $region11: #{tpu_custom_call.1} parent=5 // pred_region
        %s79 = ssub.s32 %s13, 1
      $region12: #{tpu_custom_call.1} parent=5 // pred_fallthru
        _
      %p80 = scmp.lt.s32.totalorder %s13, 2
      // Predicated region
      $region13: #{tpu_custom_call.1} parent=5 // pred_check
        %p81 = pneg %p80
      $region14: #{tpu_custom_call.1} parent=5 // pred_check_branch
        %83 = sbr.rel (%p81) target = $region16
      $region15: #{tpu_custom_call.1} parent=5 // pred_region
        // Predicated region
        $region17: #{tpu_custom_call.1} parent=15 // pred_check
          %p84 = pneg %p33
        $region18: #{tpu_custom_call.1} parent=15 // pred_check_branch
          %86 = sbr.rel (%p84) target = $region20
        $region19: #{tpu_custom_call.1} parent=15 // pred_region
          %s87 = sand.u32 %s23, 1
          %s88 = scalar_lea.sflag [#allocation3], %s87
          %s89 = sand.u32 %s23, 1
          %s90 = smul.addr %s89, 8
          %s91 = scalar_lea.vmem [#allocation2], %s90
          %s93 = ssub.s32 128, 128
          %94 = vsyncadd %s88, %s93
          %s95 = smul.addr %s13, 128
          %s96 = scalar_lea.hbm %s0, %s95
          %s98 = sshll.u32 %s91, 4
          %s99 = int_to_ptr.vmem [resolvable:$true] %s98
          %101 = dma.hbm_to_vmem [thread:$0]  %s96, 128, %s99, %s88
        $region20: #{tpu_custom_call.1} parent=15 // pred_fallthru
          _
      $region16: #{tpu_custom_call.1} parent=5 // pred_fallthru
        _
      %p102 = scmp.le.s32.totalorder 1, %s13
      %p103 = scmp.lt.s32.totalorder %s13, 3
      %p104 = pnand %p102, %p103
      %p105 = pneg %p104
      // Predicated region
      $region21: #{tpu_custom_call.1} parent=5 // pred_check
        _
      $region22: #{tpu_custom_call.1} parent=5 // pred_check_branch
        %107 = sbr.rel (%p104) target = $region24
      $region23: #{tpu_custom_call.1} parent=5 // pred_region
        %s108 = ssub.s32 %s13, 1
        %s109 = sand.u32 %s26, 1
        %s110 = scalar_lea.sflag [#allocation3], %s109
        %s111 = sand.u32 %s26, 1
        %s112 = smul.addr %s111, 8
        %s113 = scalar_lea.vmem [#allocation2], %s112
        // Predicated region
        $region25: #{tpu_custom_call.1} parent=23 // pred_check
          %p114 = pneg %p39
        $region26: #{tpu_custom_call.1} parent=23 // pred_check_branch
          %116 = sbr.rel (%p114) target = $region28
        $region27: #{tpu_custom_call.1} parent=23 // pred_region
          %117 = dma.done %s110, 128
        $region28: #{tpu_custom_call.1} parent=23 // pred_fallthru
          _
        %s118 = sand.u32 %s26, 1
        %s119 = scalar_lea.sflag [#allocation3], %s118
        %s120 = sand.u32 %s26, 1
        %s121 = smul.addr %s120, 8
        %s122 = scalar_lea.vmem [#allocation2], %s121
        %p123 = pneg %p39
        %p124 = pneg %p36
        %p125 = pneg %p65
        %p126 = pneg %p62
        %s127 = sand.u32 %s52, 1
        %s128 = scalar_lea.sflag [#allocation4], %s127
        %s129 = sand.u32 %s52, 1
        %s130 = smul.addr %s129, 8
        %s131 = scalar_lea.vmem [#allocation5], %s130
        %v132 = vld [vmem:[%s113] sm:$0xff]
        %v133 = vsub.f32 0.0, %v132
        %v134 = vmul.f32 %v133, 1.442695
        %v135 = vpow.pop %v134
        %v136 = vadd.f32 %v135, 1.0
        %v137 = vrcp.pop %v136
        %v138 = vmul.f32 %v132, %v137
        %139 = vst [vmem:[%s131] sm:$0xff] %v138
        %s140 = sand.u32 %s52, 1
        %s141 = scalar_lea.sflag [#allocation4], %s140
        %s142 = sand.u32 %s52, 1
        %s143 = smul.addr %s142, 8
        %s144 = scalar_lea.vmem [#allocation5], %s143
        // Predicated region
        $region29: #{tpu_custom_call.1} parent=23 // pred_check
          %p145 = pneg %p62
        $region30: #{tpu_custom_call.1} parent=23 // pred_check_branch
          %147 = sbr.rel (%p145) target = $region32
        $region31: #{tpu_custom_call.1} parent=23 // pred_region
          %s149 = ssub.s32 128, 128
          %150 = vsyncadd %s141, %s149
          %s151 = smul.addr %s18, 128
          %s152 = scalar_lea.hbm %s1, %s151
          %s154 = sshll.u32 %s144, 4
          %s155 = int_to_ptr.vmem [resolvable:$true] %s154
          %157 = dma.vmem_to_hbm [thread:$0]  %s155, 128, %s152, %s141
        $region32: #{tpu_custom_call.1} parent=23 // pred_fallthru
          _
      $region24: #{tpu_custom_call.1} parent=5 // pred_fallthru
        _
      %p158 = scmp.le.s32.totalorder 2, %s13
      // Predicated region
      $region33: #{tpu_custom_call.1} parent=5 // pred_check
        %p159 = pneg %p158
      $region34: #{tpu_custom_call.1} parent=5 // pred_check_branch
        %161 = sbr.rel (%p159) target = $region36
      $region35: #{tpu_custom_call.1} parent=5 // pred_region
        %s162 = ssub.s32 %s13, 2
        // Predicated region
        $region37: #{tpu_custom_call.1} parent=35 // pred_check
          %p163 = pneg %p68
        $region38: #{tpu_custom_call.1} parent=35 // pred_check_branch
          %165 = sbr.rel (%p163) target = $region40
        $region39: #{tpu_custom_call.1} parent=35 // pred_region
          %s166 = sand.u32 %s53, 1
          %s167 = scalar_lea.sflag [#allocation4], %s166
          %s168 = sand.u32 %s53, 1
          %s169 = smul.addr %s168, 8
          %s170 = scalar_lea.vmem [#allocation5], %s169
          %171 = dma.done %s167, 128
        $region40: #{tpu_custom_call.1} parent=35 // pred_fallthru
          _
      $region36: #{tpu_custom_call.1} parent=5 // pred_fallthru
        _
    $region6: #{tpu_custom_call.1} parent=1 // loop_footer
      %s17 = sadd.s32 1, %s13
    $region7: #{tpu_custom_call.1} parent=1 // loop_footer_branch
      %12 = sbr.rel target = $region3
    $region8: #{tpu_custom_call.1} parent=1 // loop_exit
      _
    %172 = vsyncpa [#allocation3], 1
    %s173 = scalar_lea.sflag [#allocation3], 1
    %174 = vsyncpa %s173, 1
    %175 = vsyncpa [#allocation4], 1
    %s176 = scalar_lea.sflag [#allocation4], 1
    %177 = vsyncpa %s176, 1

</llo_original>
